<compile_context>
chip_gen: v7x
topology: tpu7x:2x2x1
jax: 0.10.0
libtpu: 0.0.40
codegen_flags: <defaults>
</compile_context>

<pallas_src>
import functools

import jax
import jax.numpy as jnp
from jax import lax
from jax.experimental import pallas as pl
from jax.experimental.pallas import tpu as pltpu


_W3_ROWS = 8  # keep the final matmul M=8 (full sublane); only row 0 is stored


def _rewarder_kernel(x_ref, w1_ref, b1_ref, w2_ref, b2_ref, w3_ref, b3_ref,
                     out_ref):
    # x_ref: [tile_b, n_in] -- natural obs layout, batch on sublanes.
    x = x_ref[...].astype(w1_ref.dtype)                    # cast in-kernel (no HBM pre-pass)
    # [64, n_in] . [tile_b, n_in]^T -> [64, tile_b]: batch moves to the lane axis.
    h = lax.dot_general(w1_ref[...], x, (((1,), (1,)), ((), ())),
                        preferred_element_type=jnp.float32)
    h = jnp.maximum(h + b1_ref[...], 0.0).astype(w2_ref.dtype)
    h = jnp.dot(w2_ref[...], h, preferred_element_type=jnp.float32)
    h = jnp.maximum(h + b2_ref[...], 0.0).astype(w3_ref.dtype)
    d = jnp.dot(w3_ref[...], h, preferred_element_type=jnp.float32)  # [8, tile_b]
    r = d[0:1, :] + b3_ref[...]                            # row 0 = pred - target
    out_ref[...] = r * r                                   # [1, tile_b], lane-dense


def _round_up(x, m):
    return ((x + m - 1) // m) * m


def pack_rewarder_params(target_params, pred_params, compute_dtype=jnp.bfloat16):
    """Fuse target & pred Value() nets into one block-diagonal width-64 MLP.

    Call once per parameter update; pass the result to rewarder_apply.
    """
    (tw1, tb1), (tw2, tb2), (tw3, tb3) = target_params
    (pw1, pb1), (pw2, pb2), (pw3, pb3) = pred_params
    size = tw1.shape[0]                                    # hidden width (32)

    w1 = jnp.concatenate([pw1, tw1], axis=0)               # [2*size, n_in]
    b1 = jnp.concatenate([pb1, tb1], axis=0)[:, None]      # [2*size, 1]

    w2 = jnp.zeros((2 * size, 2 * size), jnp.float32)
    w2 = w2.at[:size, :size].set(pw2).at[size:, size:].set(tw2)
    b2 = jnp.concatenate([pb2, tb2], axis=0)[:, None]      # [2*size, 1]

    w3_row = jnp.concatenate([pw3, -tw3], axis=1)          # [1, 2*size]
    w3 = jnp.zeros((_W3_ROWS, 2 * size), jnp.float32).at[0:1, :].set(w3_row)
    b3 = (pb3 - tb3).reshape(1, 1)                         # [1, 1]

    return (w1.astype(compute_dtype), b1.astype(jnp.float32),
            w2.astype(compute_dtype), b2.astype(jnp.float32),
            w3.astype(compute_dtype), b3.astype(jnp.float32))


def _choose_tile(B, tile_b):
    tile = max(128, (int(tile_b) // 128) * 128)            # lane-aligned
    b128 = _round_up(B, 128)
    tile = min(tile, b128)
    # v7x megacore: prefer >= 2 parallel grid steps when the batch allows it.
    if b128 >= 256 and (B + tile - 1) // tile < 2:
        tile = max(128, (b128 // 2) // 128 * 128)
    return tile


@functools.partial(jax.jit, static_argnames=("tile_b",))
def rewarder_apply(fused_params, obs, tile_b=2048):
    """obs: [B, n_inputs] (or [n_inputs]).  fused_params from pack_rewarder_params."""
    if obs.ndim == 1:
        obs = obs[None, :]
    B, n_in = obs.shape
    w1, b1, w2, b2, w3, b3 = fused_params
    weights = (w1, b1, w2, b2, w3, b3)

    tile = _choose_tile(B, tile_b)
    if B < tile:                                           # tiny batches only: avoid a
        obs = jnp.pad(obs, ((0, tile - B), (0, 0)))        # block larger than the array
    n_blocks = (obs.shape[0] + tile - 1) // tile
    b_out = n_blocks * tile                                # output writes never go OOB

    def resident_spec(arr):
        # Whole array, same block every grid step -> weights stay resident in VMEM.
        return pl.BlockSpec(arr.shape, lambda i: (0, 0))

    flops = 2 * B * (n_in * 64 + 64 * 64 + _W3_ROWS * 64)
    bytes_accessed = (int(obs.size) * obs.dtype.itemsize + b_out * 4
                      + sum(int(w.size) * w.dtype.itemsize for w in weights))

    out = pl.pallas_call(
        _rewarder_kernel,
        out_shape=jax.ShapeDtypeStruct((1, b_out), jnp.float32),
        grid=(n_blocks,),
        in_specs=[pl.BlockSpec((tile, n_in), lambda i: (i, 0))]
                 + [resident_spec(w) for w in weights],
        out_specs=pl.BlockSpec((1, tile), lambda i: (0, i)),
        compiler_params=pltpu.CompilerParams(
            dimension_semantics=("parallel",)),
        cost_estimate=pl.CostEstimate(flops=flops, transcendentals=0,
                                      bytes_accessed=bytes_accessed),
    )(obs, *weights)

    # Row 0 holds the result; torch .squeeze() maps (B, 1) -> (B,) (scalar if B == 1).
    return jnp.squeeze(out[0, :B])


def rewarder_forward(obs, target_params, pred_params, *,
                     tile_b=2048, compute_dtype=jnp.bfloat16):
    """Convenience wrapper (repacks weights every call; prefer pack + apply)."""
    fused = pack_rewarder_params(target_params, pred_params, compute_dtype)
    return rewarder_apply(fused, obs, tile_b=tile_b)


# ----------------------- init + pure-JAX reference -----------------------

def _init_linear(key, fan_in, fan_out):
    # PyTorch nn.Linear default init: U(-1/sqrt(fan_in), 1/sqrt(fan_in)),
    # weight stored [out_features, in_features] (torch layout).
    kw, kb = jax.random.split(key)
    bound = 1.0 / jnp.sqrt(float(fan_in))
    w = jax.random.uniform(kw, (fan_out, fan_in), jnp.float32, -bound, bound)
    b = jax.random.uniform(kb, (fan_out,), jnp.float32, -bound, bound)
    return w, b


def init_value_params(key, n_inputs, n_outputs=1, size=32):
    k1, k2, k3 = jax.random.split(key, 3)
    return (_init_linear(k1, n_inputs, size),
            _init_linear(k2, size, size),
            _init_linear(k3, size, n_outputs))


def _value_ref(params, x):
    hi = lax.Precision.HIGHEST   # accurate f32 ground truth
    (w1, b1), (w2, b2), (w3, b3) = params
    h = jnp.maximum(jnp.dot(x, w1.T, precision=hi) + b1, 0.0)
    h = jnp.maximum(jnp.dot(h, w2.T, precision=hi) + b2, 0.0)
    return jnp.dot(h, w3.T, precision=hi) + b3


def _rewarder_ref(target_params, pred_params, obs):
    return jnp.squeeze((_value_ref(pred_params, obs)
                        - _value_ref(target_params, obs)) ** 2)


if __name__ == "__main__":
    key = jax.random.PRNGKey(0)
    k_obs, k_tgt, k_pred, k_big = jax.random.split(key, 4)

    B, n_inputs = 8, 16
    obs = jax.random.normal(k_obs, (B, n_inputs), jnp.float32)
    target_params = init_value_params(k_tgt, n_inputs, n_outputs=1, size=32)
    pred_params = init_value_params(k_pred, n_inputs, n_outputs=1, size=32)
    ref = _rewarder_ref(target_params, pred_params, obs)

    # f32 compute path; weight packing hoisted out of the (jitted) per-call path.
    fused_f32 = pack_rewarder_params(target_params, pred_params, jnp.float32)
    out = jax.block_until_ready(rewarder_apply(fused_f32, obs))
    assert out.shape == (B,), out.shape
    assert jnp.allclose(out, ref, atol=1e-3, rtol=2e-2), (out, ref)

    # Larger, non-tile-divisible batch: exercises the multi-step parallel grid
    # (>= 2 steps so both v7x TensorCores are engaged) and partial last block.
    Bb = 1000
    obs_big = jax.random.normal(k_big, (Bb, n_inputs), jnp.float32)
    out_big = jax.block_until_ready(rewarder_apply(fused_f32, obs_big))
    ref_big = _rewarder_ref(target_params, pred_params, obs_big)
    assert out_big.shape == (Bb,), out_big.shape
    assert jnp.allclose(out_big, ref_big, atol=1e-3, rtol=2e-2), "large-batch mismatch"

    # Default bf16 MXU-input path (f32 accumulation) -- loose tolerance for bf16.
    out_bf16 = jax.block_until_ready(
        rewarder_forward(obs, target_params, pred_params))
    assert out_bf16.shape == (B,), out_bf16.shape
    assert jnp.allclose(out_bf16, ref, atol=1e-2, rtol=2.5e-1), (out_bf16, ref)

    print("KERNEL_OK")
</pallas_src>

<mosaic_0001>
module attributes {stable_mosaic.version = 11 : i64} {
  func.func @_rewarder_kernel(%arg0: i32, %arg1: memref<128x16xf32, #tpu.memory_space<vmem>>, %arg2: memref<64x16xf32, #tpu.memory_space<vmem>>, %arg3: memref<64x1xf32, #tpu.memory_space<vmem>>, %arg4: memref<64x64xf32, #tpu.memory_space<vmem>>, %arg5: memref<64x1xf32, #tpu.memory_space<vmem>>, %arg6: memref<8x64xf32, #tpu.memory_space<vmem>>, %arg7: memref<1x1xf32, #tpu.memory_space<vmem>>, %arg8: memref<1x128xf32, #tpu.memory_space<vmem>>) attributes {dimension_semantics = [#tpu.dimension_semantics<parallel>], iteration_bounds = array<i64: 1>, scalar_prefetch = 0 : i64, scratch_operands = 0 : i64, tpu.core_type = #tpu.core_type<tc>, window_params = [{transform_indices = @transform_0, window_bounds = array<i64: 128, 16>}, {pipeline_mode = #tpu.pipeline_mode<synchronous>, transform_indices = @transform_1, window_bounds = array<i64: 64, 16>}, {pipeline_mode = #tpu.pipeline_mode<synchronous>, transform_indices = @transform_2, window_bounds = array<i64: 64, 1>}, {pipeline_mode = #tpu.pipeline_mode<synchronous>, transform_indices = @transform_3, window_bounds = array<i64: 64, 64>}, {pipeline_mode = #tpu.pipeline_mode<synchronous>, transform_indices = @transform_4, window_bounds = array<i64: 64, 1>}, {pipeline_mode = #tpu.pipeline_mode<synchronous>, transform_indices = @transform_5, window_bounds = array<i64: 8, 64>}, {pipeline_mode = #tpu.pipeline_mode<synchronous>, transform_indices = @transform_6, window_bounds = array<i64: 1, 1>}, {transform_indices = @transform_7, window_bounds = array<i64: 1, 128>}]} {
    %c0 = arith.constant 0 : index
    %c0_0 = arith.constant 0 : index
    %0 = vector.load %arg1[%c0, %c0_0] : memref<128x16xf32, #tpu.memory_space<vmem>>, vector<128x16xf32>
    %c0_1 = arith.constant 0 : index
    %c0_2 = arith.constant 0 : index
    %1 = vector.load %arg2[%c0_1, %c0_2] : memref<64x16xf32, #tpu.memory_space<vmem>>, vector<64x16xf32>
    %cst = arith.constant dense<0.000000e+00> : vector<64x128xf32>
    %2 = tpu.matmul %1, %0, %cst {dimension_numbers = #tpu.dot_dimension_numbers<[1], [1], [0], [0], [0, 0, 1, 0], [], []>} : vector<64x16xf32>, vector<128x16xf32>, vector<64x128xf32> -> vector<64x128xf32>
    %c0_3 = arith.constant 0 : index
    %c0_4 = arith.constant 0 : index
    %3 = vector.load %arg3[%c0_3, %c0_4] : memref<64x1xf32, #tpu.memory_space<vmem>>, vector<64x1xf32>
    %4 = vector.broadcast %3 : vector<64x1xf32> to vector<64x128xf32>
    %5 = arith.addf %2, %4 : vector<64x128xf32>
    %cst_5 = arith.constant 0.000000e+00 : f32
    %6 = vector.broadcast %cst_5 : f32 to vector<64x128xf32>
    %7 = arith.maximumf %5, %6 : vector<64x128xf32>
    %c0_6 = arith.constant 0 : index
    %c0_7 = arith.constant 0 : index
    %8 = vector.load %arg4[%c0_6, %c0_7] : memref<64x64xf32, #tpu.memory_space<vmem>>, vector<64x64xf32>
    %cst_8 = arith.constant dense<0.000000e+00> : vector<64x128xf32>
    %9 = tpu.matmul %8, %7, %cst_8 {dimension_numbers = #tpu.dot_dimension_numbers<[1], [0], [0], [1], [0, 0, 1, 1], [], []>} : vector<64x64xf32>, vector<64x128xf32>, vector<64x128xf32> -> vector<64x128xf32>
    %c0_9 = arith.constant 0 : index
    %c0_10 = arith.constant 0 : index
    %10 = vector.load %arg5[%c0_9, %c0_10] : memref<64x1xf32, #tpu.memory_space<vmem>>, vector<64x1xf32>
    %11 = vector.broadcast %10 : vector<64x1xf32> to vector<64x128xf32>
    %12 = arith.addf %9, %11 : vector<64x128xf32>
    %cst_11 = arith.constant 0.000000e+00 : f32
    %13 = vector.broadcast %cst_11 : f32 to vector<64x128xf32>
    %14 = arith.maximumf %12, %13 : vector<64x128xf32>
    %c0_12 = arith.constant 0 : index
    %c0_13 = arith.constant 0 : index
    %15 = vector.load %arg6[%c0_12, %c0_13] : memref<8x64xf32, #tpu.memory_space<vmem>>, vector<8x64xf32>
    %cst_14 = arith.constant dense<0.000000e+00> : vector<8x128xf32>
    %16 = tpu.matmul %15, %14, %cst_14 {dimension_numbers = #tpu.dot_dimension_numbers<[1], [0], [0], [1], [0, 0, 1, 1], [], []>} : vector<8x64xf32>, vector<64x128xf32>, vector<8x128xf32> -> vector<8x128xf32>
    %17 = vector.extract_strided_slice %16 {offsets = [0, 0], sizes = [1, 128], strides = [1, 1]} : vector<8x128xf32> to vector<1x128xf32>
    %c0_15 = arith.constant 0 : index
    %c0_16 = arith.constant 0 : index
    %18 = vector.load %arg7[%c0_15, %c0_16] : memref<1x1xf32, #tpu.memory_space<vmem>>, vector<1x1xf32>
    %19 = vector.broadcast %18 : vector<1x1xf32> to vector<1x128xf32>
    %20 = arith.addf %17, %19 : vector<1x128xf32>
    %21 = arith.mulf %20, %20 : vector<1x128xf32>
    %c0_17 = arith.constant 0 : index
    %c0_18 = arith.constant 0 : index
    %22 = vector.load %arg8[%c0_17, %c0_18] : memref<1x128xf32, #tpu.memory_space<vmem>>, vector<1x128xf32>
    tpu.vector_store %arg8[%c0_17, %c0_18], %21 {strides = array<i32>} : memref<1x128xf32, #tpu.memory_space<vmem>>, vector<1x128xf32>,
    return
  }
  func.func @transform_0(%arg0: i32) -> (i32, i32) {
    %c0_i32 = arith.constant 0 : i32
    %c0_i32_0 = arith.constant 0 : i32
    return %arg0, %c0_i32 : i32, i32
  }
  func.func @transform_1(%arg0: i32) -> (i32, i32) {
    %c0_i32 = arith.constant 0 : i32
    %c0_i32_0 = arith.constant 0 : i32
    %c0_i32_1 = arith.constant 0 : i32
    return %c0_i32, %c0_i32_0 : i32, i32
  }
  func.func @transform_2(%arg0: i32) -> (i32, i32) {
    %c0_i32 = arith.constant 0 : i32
    %c0_i32_0 = arith.constant 0 : i32
    %c0_i32_1 = arith.constant 0 : i32
    return %c0_i32, %c0_i32_0 : i32, i32
  }
  func.func @transform_3(%arg0: i32) -> (i32, i32) {
    %c0_i32 = arith.constant 0 : i32
    %c0_i32_0 = arith.constant 0 : i32
    %c0_i32_1 = arith.constant 0 : i32
    return %c0_i32, %c0_i32_0 : i32, i32
  }
  func.func @transform_4(%arg0: i32) -> (i32, i32) {
    %c0_i32 = arith.constant 0 : i32
    %c0_i32_0 = arith.constant 0 : i32
    %c0_i32_1 = arith.constant 0 : i32
    return %c0_i32, %c0_i32_0 : i32, i32
  }
  func.func @transform_5(%arg0: i32) -> (i32, i32) {
    %c0_i32 = arith.constant 0 : i32
    %c0_i32_0 = arith.constant 0 : i32
    %c0_i32_1 = arith.constant 0 : i32
    return %c0_i32, %c0_i32_0 : i32, i32
  }
  func.func @transform_6(%arg0: i32) -> (i32, i32) {
    %c0_i32 = arith.constant 0 : i32
    %c0_i32_0 = arith.constant 0 : i32
    %c0_i32_1 = arith.constant 0 : i32
    return %c0_i32, %c0_i32_0 : i32, i32
  }
  func.func @transform_7(%arg0: i32) -> (i32, i32) {
    %c0_i32 = arith.constant 0 : i32
    %c0_i32_0 = arith.constant 0 : i32
    return %c0_i32, %arg0 : i32, i32
  }
}

</mosaic_0001>

<llo_original>
// kernel: rewarder_apply.1
$region0: #{rewarder_apply.1}
  #allocation0 [shape = 'u32[]', space=smem, size = 0x4, offset = 0x4, fixed_abs, tag = 'smem constant byte address 0x4 - core index']
  #allocation1 [shape = 'u32[144,128]{1,0:T(1,128)}', space=vmem, size = 0x12000, scoped, tag = 'internal scratch']
  #allocation2 [shape = 'f32[1,1]{1,0:T(1,128)S(1)}', space=vmem, size = 0x200, scoped, tag = 'scoped memory for rewarder_apply.1']
  %s0 = inlined_call_operand.vmem [shape: f32[128,16], index: 0, kind: input, shape index: {}]
  %s1 = inlined_call_operand.vmem [shape: f32[64,16], index: 1, kind: input, shape index: {}]
  %s2 = inlined_call_operand.vmem [shape: f32[64,1], index: 2, kind: input, shape index: {}]
  %s3 = inlined_call_operand.vmem [shape: f32[64,64], index: 3, kind: input, shape index: {}]
  %s4 = inlined_call_operand.vmem [shape: f32[64,1], index: 4, kind: input, shape index: {}]
  %s5 = inlined_call_operand.vmem [shape: f32[8,64], index: 5, kind: input, shape index: {}]
  %s6 = inlined_call_operand.<no memory space> [shape: f32[1,1], index: 6, kind: input, shape index: {}]
  %s7 = inlined_call_operand.vmem [shape: f32[1,128], index: 7, kind: output, shape index: {}]
  %s8 = sld [smem:[#allocation0]]
  $region38: #{rewarder_apply.1} parent=0
    _
  %s10 = ssub.s32 1, %s8
  %s11 = scalar_select 0, %s10, %s8
  %v12 = vstv %s6
  %13 = vst [vmem:[#allocation2] sm:$0x1] %v12
  // Predicated region
  $region2: #{rewarder_apply.1} parent=0 // pred_check
    _
  $region3: #{rewarder_apply.1} parent=0 // pred_check_branch
    %15 = sbr.rel (0) target = $region5
  $region4: #{rewarder_apply.1} parent=0 // pred_region
    _
  $region5: #{rewarder_apply.1} parent=0 // pred_fallthru
    _
  // Predicated region
  $region6: #{rewarder_apply.1} parent=0 // pred_check
    _
  $region7: #{rewarder_apply.1} parent=0 // pred_check_branch
    %17 = sbr.rel (0) target = $region9
  $region8: #{rewarder_apply.1} parent=0 // pred_region
    _
  $region9: #{rewarder_apply.1} parent=0 // pred_fallthru
    _
  // Predicated region
  $region10: #{rewarder_apply.1} parent=0 // pred_check
    _
  $region11: #{rewarder_apply.1} parent=0 // pred_check_branch
    %19 = sbr.rel (0) target = $region13
  $region12: #{rewarder_apply.1} parent=0 // pred_region
    _
  $region13: #{rewarder_apply.1} parent=0 // pred_fallthru
    _
  // Predicated region
  $region14: #{rewarder_apply.1} parent=0 // pred_check
    _
  $region15: #{rewarder_apply.1} parent=0 // pred_check_branch
    %21 = sbr.rel (0) target = $region17
  $region16: #{rewarder_apply.1} parent=0 // pred_region
    _
  $region17: #{rewarder_apply.1} parent=0 // pred_fallthru
    _
  // Predicated region
  $region18: #{rewarder_apply.1} parent=0 // pred_check
    _
  $region19: #{rewarder_apply.1} parent=0 // pred_check_branch
    %23 = sbr.rel (0) target = $region21
  $region20: #{rewarder_apply.1} parent=0 // pred_region
    _
  $region21: #{rewarder_apply.1} parent=0 // pred_fallthru
    _
  // Predicated region
  $region22: #{rewarder_apply.1} parent=0 // pred_check
    _
  $region23: #{rewarder_apply.1} parent=0 // pred_check_branch
    %25 = sbr.rel (0) target = $region25
  $region24: #{rewarder_apply.1} parent=0 // pred_region
    _
  $region25: #{rewarder_apply.1} parent=0 // pred_fallthru
    _
  // Predicated region
  $region26: #{rewarder_apply.1} parent=0 // pred_check
    _
  $region27: #{rewarder_apply.1} parent=0 // pred_check_branch
    %27 = sbr.rel (0) target = $region29
  $region28: #{rewarder_apply.1} parent=0 // pred_region
    _
  $region29: #{rewarder_apply.1} parent=0 // pred_fallthru
    _
  %v28 = vld [vmem:[%s0] sm:$0xff]
  %v29 = vld [vmem:[%s0 + $0x8] sm:$0xff]
  %v30 = vld [vmem:[%s0 + $0x10] sm:$0xff]
  %v31 = vld [vmem:[%s0 + $0x18] sm:$0xff]
  %v32 = vld [vmem:[%s0 + $0x20] sm:$0xff]
  %v33 = vld [vmem:[%s0 + $0x28] sm:$0xff]
  %v34 = vld [vmem:[%s0 + $0x30] sm:$0xff]
  %v35 = vld [vmem:[%s0 + $0x38] sm:$0xff]
  %v36 = vld [vmem:[%s0 + $0x40] sm:$0xff]
  %v37 = vld [vmem:[%s0 + $0x48] sm:$0xff]
  %v38 = vld [vmem:[%s0 + $0x50] sm:$0xff]
  %v39 = vld [vmem:[%s0 + $0x58] sm:$0xff]
  %v40 = vld [vmem:[%s0 + $0x60] sm:$0xff]
  %v41 = vld [vmem:[%s0 + $0x68] sm:$0xff]
  %v42 = vld [vmem:[%s0 + $0x70] sm:$0xff]
  %v43 = vld [vmem:[%s0 + $0x78] sm:$0xff]
  %v44 = vld [vmem:[%s1] sm:$0xff]
  %v45 = vld [vmem:[%s1 + $0x8] sm:$0xff]
  %v46 = vld [vmem:[%s1 + $0x10] sm:$0xff]
  %v47 = vld [vmem:[%s1 + $0x18] sm:$0xff]
  %v48 = vld [vmem:[%s1 + $0x20] sm:$0xff]
  %v49 = vld [vmem:[%s1 + $0x28] sm:$0xff]
  %v50 = vld [vmem:[%s1 + $0x30] sm:$0xff]
  %v51 = vld [vmem:[%s1 + $0x38] sm:$0xff]
  %v52 = vld [vmem:[%s2] sm:$0xff]
  %v53 = vld [vmem:[%s2 + $0x8] sm:$0xff]
  %v54 = vld [vmem:[%s2 + $0x10] sm:$0xff]
  %v55 = vld [vmem:[%s2 + $0x18] sm:$0xff]
  %v56 = vld [vmem:[%s2 + $0x20] sm:$0xff]
  %v57 = vld [vmem:[%s2 + $0x28] sm:$0xff]
  %v58 = vld [vmem:[%s2 + $0x30] sm:$0xff]
  %v59 = vld [vmem:[%s2 + $0x38] sm:$0xff]
  %61 = vset.pattern.permute.xlu0 0
  %62 = vperm.xlu0 %61, %v52
  %v63 = vpop.permute.xlu0 %62
  %66 = vset.pattern.permute.xlu0 0
  %67 = vperm.xlu0 %66, %v53
  %v68 = vpop.permute.xlu0 %67
  %71 = vset.pattern.permute.xlu0 0
  %72 = vperm.xlu0 %71, %v54
  %v73 = vpop.permute.xlu0 %72
  %76 = vset.pattern.permute.xlu0 0
  %77 = vperm.xlu0 %76, %v55
  %v78 = vpop.permute.xlu0 %77
  %81 = vset.pattern.permute.xlu0 0
  %82 = vperm.xlu0 %81, %v56
  %v83 = vpop.permute.xlu0 %82
  %86 = vset.pattern.permute.xlu0 0
  %87 = vperm.xlu0 %86, %v57
  %v88 = vpop.permute.xlu0 %87
  %91 = vset.pattern.permute.xlu0 0
  %92 = vperm.xlu0 %91, %v58
  %v93 = vpop.permute.xlu0 %92
  %96 = vset.pattern.permute.xlu0 0
  %97 = vperm.xlu0 %96, %v59
  %v98 = vpop.permute.xlu0 %97
  %vm100 = vcmask 130048
  %v102 = vsel %vm100, %v44, 0
  %v105 = vsel %vm100, %v45, 0
  %v108 = vsel %vm100, %v46, 0
  %v111 = vsel %vm100, %v47, 0
  %v114 = vsel %vm100, %v48, 0
  %v117 = vsel %vm100, %v49, 0
  %v120 = vsel %vm100, %v50, 0
  %v123 = vsel %vm100, %v51, 0
  %v126 = vsel %vm100, %v28, 0
  %v129 = vsel %vm100, %v29, 0
  %v132 = vsel %vm100, %v30, 0
  %v135 = vsel %vm100, %v31, 0
  %v138 = vsel %vm100, %v32, 0
  %v141 = vsel %vm100, %v33, 0
  %v144 = vsel %vm100, %v34, 0
  %v147 = vsel %vm100, %v35, 0
  %v150 = vsel %vm100, %v36, 0
  %v153 = vsel %vm100, %v37, 0
  %v156 = vsel %vm100, %v38, 0
  %v159 = vsel %vm100, %v39, 0
  %v162 = vsel %vm100, %v40, 0
  %v165 = vsel %vm100, %v41, 0
  %v168 = vsel %vm100, %v42, 0
  %v171 = vsel %vm100, %v43, 0
  %173 = vmatprep.subr.mxu0 0.0
  %174 = vmatpush1.xpose.msra.mxu0 %v126
  %175 = vmatprep.subr.mxu0 0.0
  %176 = vmatpush1.xpose.msra.mxu0 %v129
  %177 = vmatprep.subr.mxu0 0.0
  %178 = vmatpush1.xpose.msra.mxu0 %v132
  %179 = vmatprep.subr.mxu0 0.0
  %180 = vmatpush1.xpose.msra.mxu0 %v135
  %181 = vmatprep.subr.mxu0 0.0
  %182 = vmatpush1.xpose.msra.mxu0 %v138
  %183 = vmatprep.subr.mxu0 0.0
  %184 = vmatpush1.xpose.msra.mxu0 %v141
  %185 = vmatprep.subr.mxu0 0.0
  %186 = vmatpush1.xpose.msra.mxu0 %v144
  %187 = vmatprep.subr.mxu0 0.0
  %188 = vmatpush1.xpose.msra.mxu0 %v147
  %189 = vmatprep.subr.mxu0 0.0
  %190 = vmatpush1.xpose.msra.mxu0 %v150
  %191 = vmatprep.subr.mxu0 0.0
  %192 = vmatpush1.xpose.msra.mxu0 %v153
  %193 = vmatprep.subr.mxu0 0.0
  %194 = vmatpush1.xpose.msra.mxu0 %v156
  %195 = vmatprep.subr.mxu0 0.0
  %196 = vmatpush1.xpose.msra.mxu0 %v159
  %197 = vmatprep.subr.mxu0 0.0
  %198 = vmatpush1.xpose.msra.mxu0 %v162
  %199 = vmatprep.subr.mxu0 0.0
  %200 = vmatpush1.xpose.msra.mxu0 %v165
  %201 = vmatprep.subr.mxu0 0.0
  %202 = vmatpush1.xpose.msra.mxu0 %v168
  %203 = vmatprep.subr.mxu0 0.0
  %204 = vmatpush1.xpose.msra.mxu0 %v171
  %205 = vmatprep.subr.mxu0 0.0
  %206 = vmatpush1.xpose.msra.mxu0 0.0
  %207 = vmatprep.subr.mxu0 0.0
  %208 = vmatpush1.xpose.msra.mxu0 0.0
  %209 = vmatprep.subr.mxu0 0.0
  %210 = vmatpush1.xpose.msra.mxu0 0.0
  %211 = vmatprep.subr.mxu0 0.0
  %212 = vmatpush1.xpose.msra.mxu0 0.0
  %213 = vmatprep.subr.mxu0 0.0
  %214 = vmatpush1.xpose.msra.mxu0 0.0
  %215 = vmatprep.subr.mxu0 0.0
  %216 = vmatpush1.xpose.msra.mxu0 0.0
  %217 = vmatprep.subr.mxu0 0.0
  %218 = vmatpush1.xpose.msra.mxu0 0.0
  %219 = vmatprep.subr.mxu0 0.0
  %220 = vmatpush1.xpose.msra.mxu0 0.0
  %221 = vmatprep.subr.mxu0 0.0
  %222 = vmatpush1.xpose.msra.mxu0 0.0
  %223 = vmatprep.subr.mxu0 0.0
  %224 = vmatpush1.xpose.msra.mxu0 0.0
  %225 = vmatprep.subr.mxu0 0.0
  %226 = vmatpush1.xpose.msra.mxu0 0.0
  %227 = vmatprep.subr.mxu0 0.0
  %228 = vmatpush1.xpose.msra.mxu0 0.0
  %229 = vmatprep.subr.mxu0 0.0
  %230 = vmatpush1.xpose.msra.mxu0 0.0
  %231 = vmatprep.subr.mxu0 0.0
  %232 = vmatpush1.xpose.msra.mxu0 0.0
  %233 = vmatprep.subr.mxu0 0.0
  %234 = vmatpush1.xpose.msra.mxu0 0.0
  %235 = vmatprep.subr.mxu0 0.0
  %236 = vmatpush1.xpose.msra.mxu0 0.0
  %237 = vmatprep.mubr.f32.mxu0 0.0
  %238 = vmatmul.mubr.f32.gmra.mrb[0].mxu0 %v102
  %v239 = vpop.f32.mrb[0].mxu0
  %v240 = vadd.f32 %v63, %v239
  %v241 = vpop.f32.mrb[0].mxu0
  %242 = vmatprep.mubr.f32.mxu0 0.0
  %243 = vmatmul.mubr.f32.gmra.mrb[0].mxu0 %v105
  %v244 = vpop.f32.mrb[0].mxu0
  %v245 = vadd.f32 %v68, %v244
  %v246 = vpop.f32.mrb[0].mxu0
  %247 = vmatprep.mubr.f32.mxu0 0.0
  %248 = vmatmul.mubr.f32.gmra.mrb[0].mxu0 %v108
  %v249 = vpop.f32.mrb[0].mxu0
  %v250 = vadd.f32 %v73, %v249
  %v251 = vpop.f32.mrb[0].mxu0
  %252 = vmatprep.mubr.f32.mxu0 0.0
  %253 = vmatmul.mubr.f32.gmra.mrb[0].mxu0 %v111
  %v254 = vpop.f32.mrb[0].mxu0
  %v255 = vadd.f32 %v78, %v254
  %v256 = vpop.f32.mrb[0].mxu0
  %257 = vmatprep.mubr.f32.mxu0 0.0
  %258 = vmatmul.mubr.f32.gmra.mrb[0].mxu0 %v114
  %v259 = vpop.f32.mrb[0].mxu0
  %v260 = vadd.f32 %v83, %v259
  %v261 = vpop.f32.mrb[0].mxu0
  %262 = vmatprep.mubr.f32.mxu0 0.0
  %263 = vmatmul.mubr.f32.gmra.mrb[0].mxu0 %v117
  %v264 = vpop.f32.mrb[0].mxu0
  %v265 = vadd.f32 %v88, %v264
  %v266 = vpop.f32.mrb[0].mxu0
  %267 = vmatprep.mubr.f32.mxu0 0.0
  %268 = vmatmul.mubr.f32.gmra.mrb[0].mxu0 %v120
  %v269 = vpop.f32.mrb[0].mxu0
  %v270 = vadd.f32 %v93, %v269
  %v271 = vpop.f32.mrb[0].mxu0
  %272 = vmatprep.mubr.f32.mxu0 0.0
  %273 = vmatmul.mubr.f32.gmra.mrb[0].mxu0 %v123
  %v274 = vpop.f32.mrb[0].mxu0
  %v275 = vadd.f32 %v98, %v274
  %v276 = vpop.f32.mrb[0].mxu0
  %277 = vdwg.mxu0
  %v278 = vmax.f32 %v240, 0.0
  %v279 = vmax.f32 %v245, 0.0
  %v280 = vmax.f32 %v250, 0.0
  %v281 = vmax.f32 %v255, 0.0
  %v282 = vmax.f32 %v260, 0.0
  %v283 = vmax.f32 %v265, 0.0
  %v284 = vmax.f32 %v270, 0.0
  %v285 = vmax.f32 %v275, 0.0
  %v286 = vld [vmem:[%s3] sm:$0xff]
  %v287 = vld [vmem:[%s3 + $0x8] sm:$0xff]
  %v288 = vld [vmem:[%s3 + $0x10] sm:$0xff]
  %v289 = vld [vmem:[%s3 + $0x18] sm:$0xff]
  %v290 = vld [vmem:[%s3 + $0x20] sm:$0xff]
  %v291 = vld [vmem:[%s3 + $0x28] sm:$0xff]
  %v292 = vld [vmem:[%s3 + $0x30] sm:$0xff]
  %v293 = vld [vmem:[%s3 + $0x38] sm:$0xff]
  %v294 = vld [vmem:[%s4] sm:$0xff]
  %v295 = vld [vmem:[%s4 + $0x8] sm:$0xff]
  %v296 = vld [vmem:[%s4 + $0x10] sm:$0xff]
  %v297 = vld [vmem:[%s4 + $0x18] sm:$0xff]
  %v298 = vld [vmem:[%s4 + $0x20] sm:$0xff]
  %v299 = vld [vmem:[%s4 + $0x28] sm:$0xff]
  %v300 = vld [vmem:[%s4 + $0x30] sm:$0xff]
  %v301 = vld [vmem:[%s4 + $0x38] sm:$0xff]
  %303 = vset.pattern.permute.xlu0 0
  %304 = vperm.xlu0 %303, %v294
  %v305 = vpop.permute.xlu0 %304
  %308 = vset.pattern.permute.xlu0 0
  %309 = vperm.xlu0 %308, %v295
  %v310 = vpop.permute.xlu0 %309
  %313 = vset.pattern.permute.xlu0 0
  %314 = vperm.xlu0 %313, %v296
  %v315 = vpop.permute.xlu0 %314
  %318 = vset.pattern.permute.xlu0 0
  %319 = vperm.xlu0 %318, %v297
  %v320 = vpop.permute.xlu0 %319
  %323 = vset.pattern.permute.xlu0 0
  %324 = vperm.xlu0 %323, %v298
  %v325 = vpop.permute.xlu0 %324
  %328 = vset.pattern.permute.xlu0 0
  %329 = vperm.xlu0 %328, %v299
  %v330 = vpop.permute.xlu0 %329
  %333 = vset.pattern.permute.xlu0 0
  %334 = vperm.xlu0 %333, %v300
  %v335 = vpop.permute.xlu0 %334
  %338 = vset.pattern.permute.xlu0 0
  %339 = vperm.xlu0 %338, %v301
  %v340 = vpop.permute.xlu0 %339
  %vm342 = vcmask 523264
  %v344 = vsel %vm342, %v286, 0
  %v347 = vsel %vm342, %v287, 0
  %v350 = vsel %vm342, %v288, 0
  %v353 = vsel %vm342, %v289, 0
  %v356 = vsel %vm342, %v290, 0
  %v359 = vsel %vm342, %v291, 0
  %v362 = vsel %vm342, %v292, 0
  %v365 = vsel %vm342, %v293, 0
  %367 = vmatprep.subr.mxu0 0.0
  %368 = vmatpush1.msra.mxu0 %v278
  %369 = vmatprep.subr.mxu0 0.0
  %370 = vmatpush1.msra.mxu0 %v279
  %371 = vmatprep.subr.mxu0 0.0
  %372 = vmatpush1.msra.mxu0 %v280
  %373 = vmatprep.subr.mxu0 0.0
  %374 = vmatpush1.msra.mxu0 %v281
  %375 = vmatprep.subr.mxu0 0.0
  %376 = vmatpush1.msra.mxu0 %v282
  %377 = vmatprep.subr.mxu0 0.0
  %378 = vmatpush1.msra.mxu0 %v283
  %379 = vmatprep.subr.mxu0 0.0
  %380 = vmatpush1.msra.mxu0 %v284
  %381 = vmatprep.subr.mxu0 0.0
  %382 = vmatpush1.msra.mxu0 %v285
  %383 = vmatprep.subr.mxu0 0.0
  %384 = vmatpush1.msra.mxu0 0.0
  %385 = vmatprep.subr.mxu0 0.0
  %386 = vmatpush1.msra.mxu0 0.0
  %387 = vmatprep.subr.mxu0 0.0
  %388 = vmatpush1.msra.mxu0 0.0
  %389 = vmatprep.subr.mxu0 0.0
  %390 = vmatpush1.msra.mxu0 0.0
  %391 = vmatprep.subr.mxu0 0.0
  %392 = vmatpush1.msra.mxu0 0.0
  %393 = vmatprep.subr.mxu0 0.0
  %394 = vmatpush1.msra.mxu0 0.0
  %395 = vmatprep.subr.mxu0 0.0
  %396 = vmatpush1.msra.mxu0 0.0
  %397 = vmatprep.subr.mxu0 0.0
  %398 = vmatpush1.msra.mxu0 0.0
  %399 = vmatprep.subr.mxu0 0.0
  %400 = vmatpush1.msra.mxu0 0.0
  %401 = vmatprep.subr.mxu0 0.0
  %402 = vmatpush1.msra.mxu0 0.0
  %403 = vmatprep.subr.mxu0 0.0
  %404 = vmatpush1.msra.mxu0 0.0
  %405 = vmatprep.subr.mxu0 0.0
  %406 = vmatpush1.msra.mxu0 0.0
  %407 = vmatprep.subr.mxu0 0.0
  %408 = vmatpush1.msra.mxu0 0.0
  %409 = vmatprep.subr.mxu0 0.0
  %410 = vmatpush1.msra.mxu0 0.0
  %411 = vmatprep.subr.mxu0 0.0
  %412 = vmatpush1.msra.mxu0 0.0
  %413 = vmatprep.subr.mxu0 0.0
  %414 = vmatpush1.msra.mxu0 0.0
  %415 = vmatprep.subr.mxu0 0.0
  %416 = vmatpush1.msra.mxu0 0.0
  %417 = vmatprep.subr.mxu0 0.0
  %418 = vmatpush1.msra.mxu0 0.0
  %419 = vmatprep.subr.mxu0 0.0
  %420 = vmatpush1.msra.mxu0 0.0
  %421 = vmatprep.subr.mxu0 0.0
  %422 = vmatpush1.msra.mxu0 0.0
  %423 = vmatprep.subr.mxu0 0.0
  %424 = vmatpush1.msra.mxu0 0.0
  %425 = vmatprep.subr.mxu0 0.0
  %426 = vmatpush1.msra.mxu0 0.0
  %427 = vmatprep.subr.mxu0 0.0
  %428 = vmatpush1.msra.mxu0 0.0
  %429 = vmatprep.subr.mxu0 0.0
  %430 = vmatpush1.msra.mxu0 0.0
  %431 = vmatprep.mubr.f32.mxu0 0.0
  %432 = vmatmul.mubr.f32.gmra.mrb[0].mxu0 %v344
  %v433 = vpop.f32.mrb[0].mxu0
  %v434 = vadd.f32 %v305, %v433
  %v435 = vpop.f32.mrb[0].mxu0
  %436 = vmatprep.mubr.f32.mxu0 0.0
  %437 = vmatmul.mubr.f32.gmra.mrb[0].mxu0 %v347
  %v438 = vpop.f32.mrb[0].mxu0
  %v439 = vadd.f32 %v310, %v438
  %v440 = vpop.f32.mrb[0].mxu0
  %441 = vmatprep.mubr.f32.mxu0 0.0
  %442 = vmatmul.mubr.f32.gmra.mrb[0].mxu0 %v350
  %v443 = vpop.f32.mrb[0].mxu0
  %v444 = vadd.f32 %v315, %v443
  %v445 = vpop.f32.mrb[0].mxu0
  %446 = vmatprep.mubr.f32.mxu0 0.0
  %447 = vmatmul.mubr.f32.gmra.mrb[0].mxu0 %v353
  %v448 = vpop.f32.mrb[0].mxu0
  %v449 = vadd.f32 %v320, %v448
  %v450 = vpop.f32.mrb[0].mxu0
  %451 = vmatprep.mubr.f32.mxu0 0.0
  %452 = vmatmul.mubr.f32.gmra.mrb[0].mxu0 %v356
  %v453 = vpop.f32.mrb[0].mxu0
  %v454 = vadd.f32 %v325, %v453
  %v455 = vpop.f32.mrb[0].mxu0
  %456 = vmatprep.mubr.f32.mxu0 0.0
  %457 = vmatmul.mubr.f32.gmra.mrb[0].mxu0 %v359
  %v458 = vpop.f32.mrb[0].mxu0
  %v459 = vadd.f32 %v330, %v458
  %v460 = vpop.f32.mrb[0].mxu0
  %461 = vmatprep.mubr.f32.mxu0 0.0
  %462 = vmatmul.mubr.f32.gmra.mrb[0].mxu0 %v362
  %v463 = vpop.f32.mrb[0].mxu0
  %v464 = vadd.f32 %v335, %v463
  %v465 = vpop.f32.mrb[0].mxu0
  %466 = vmatprep.mubr.f32.mxu0 0.0
  %467 = vmatmul.mubr.f32.gmra.mrb[0].mxu0 %v365
  %v468 = vpop.f32.mrb[0].mxu0
  %v469 = vadd.f32 %v340, %v468
  %v470 = vpop.f32.mrb[0].mxu0
  %471 = vdwg.mxu0
  %v472 = vmax.f32 %v434, 0.0
  %v473 = vmax.f32 %v439, 0.0
  %v474 = vmax.f32 %v444, 0.0
  %v475 = vmax.f32 %v449, 0.0
  %v476 = vmax.f32 %v454, 0.0
  %v477 = vmax.f32 %v459, 0.0
  %v478 = vmax.f32 %v464, 0.0
  %v479 = vmax.f32 %v469, 0.0
  %v480 = vld [vmem:[%s5] sm:$0xff]
  %v482 = vsel %vm342, %v480, 0
  %484 = vmatprep.subr.mxu0 0.0
  %485 = vmatpush1.msra.mxu0 %v472
  %486 = vmatprep.subr.mxu0 0.0
  %487 = vmatpush1.msra.mxu0 %v473
  %488 = vmatprep.subr.mxu0 0.0
  %489 = vmatpush1.msra.mxu0 %v474
  %490 = vmatprep.subr.mxu0 0.0
  %491 = vmatpush1.msra.mxu0 %v475
  %492 = vmatprep.subr.mxu0 0.0
  %493 = vmatpush1.msra.mxu0 %v476
  %494 = vmatprep.subr.mxu0 0.0
  %495 = vmatpush1.msra.mxu0 %v477
  %496 = vmatprep.subr.mxu0 0.0
  %497 = vmatpush1.msra.mxu0 %v478
  %498 = vmatprep.subr.mxu0 0.0
  %499 = vmatpush1.msra.mxu0 %v479
  %500 = vmatprep.subr.mxu0 0.0
  %501 = vmatpush1.msra.mxu0 0.0
  %502 = vmatprep.subr.mxu0 0.0
  %503 = vmatpush1.msra.mxu0 0.0
  %504 = vmatprep.subr.mxu0 0.0
  %505 = vmatpush1.msra.mxu0 0.0
  %506 = vmatprep.subr.mxu0 0.0
  %507 = vmatpush1.msra.mxu0 0.0
  %508 = vmatprep.subr.mxu0 0.0
  %509 = vmatpush1.msra.mxu0 0.0
  %510 = vmatprep.subr.mxu0 0.0
  %511 = vmatpush1.msra.mxu0 0.0
  %512 = vmatprep.subr.mxu0 0.0
  %513 = vmatpush1.msra.mxu0 0.0
  %514 = vmatprep.subr.mxu0 0.0
  %515 = vmatpush1.msra.mxu0 0.0
  %516 = vmatprep.subr.mxu0 0.0
  %517 = vmatpush1.msra.mxu0 0.0
  %518 = vmatprep.subr.mxu0 0.0
  %519 = vmatpush1.msra.mxu0 0.0
  %520 = vmatprep.subr.mxu0 0.0
  %521 = vmatpush1.msra.mxu0 0.0
  %522 = vmatprep.subr.mxu0 0.0
  %523 = vmatpush1.msra.mxu0 0.0
  %524 = vmatprep.subr.mxu0 0.0
  %525 = vmatpush1.msra.mxu0 0.0
  %526 = vmatprep.subr.mxu0 0.0
  %527 = vmatpush1.msra.mxu0 0.0
  %528 = vmatprep.subr.mxu0 0.0
  %529 = vmatpush1.msra.mxu0 0.0
  %530 = vmatprep.subr.mxu0 0.0
  %531 = vmatpush1.msra.mxu0 0.0
  %532 = vmatprep.subr.mxu0 0.0
  %533 = vmatpush1.msra.mxu0 0.0
  %534 = vmatprep.subr.mxu0 0.0
  %535 = vmatpush1.msra.mxu0 0.0
  %536 = vmatprep.subr.mxu0 0.0
  %537 = vmatpush1.msra.mxu0 0.0
  %538 = vmatprep.subr.mxu0 0.0
  %539 = vmatpush1.msra.mxu0 0.0
  %540 = vmatprep.subr.mxu0 0.0
  %541 = vmatpush1.msra.mxu0 0.0
  %542 = vmatprep.subr.mxu0 0.0
  %543 = vmatpush1.msra.mxu0 0.0
  %544 = vmatprep.subr.mxu0 0.0
  %545 = vmatpush1.msra.mxu0 0.0
  %546 = vmatprep.subr.mxu0 0.0
  %547 = vmatpush1.msra.mxu0 0.0
  %548 = vmatprep.mubr.f32.mxu0 0.0
  %549 = vmatmul.mubr.f32.gmra.mrb[0].mxu0 %v482
  %v550 = vpop.f32.mrb[0].mxu0
  %v551 = vadd.f32 0.0, %v550
  %v552 = vpop.f32.mrb[0].mxu0
  %553 = vdwg.mxu0
  %v554 = vld [vmem:[#allocation2] sm:$0x1]
  %556 = vset.pattern.permute.xlu0 0
  %557 = vperm.xlu0 %556, %v554
  %v558 = vpop.permute.xlu0 %557
  %v560 = vlaneseq
  %v561 = vshrl.u32 %v560, 7
  %v562 = vsub.s32 0, %v561
  %v563 = vrot.slane %v558, %v562
  %v564 = vadd.f32 %v551, %v563
  %v565 = vmul.f32 %v564, %v564
  %566 = vst [vmem:[%s7] sm:$0x1] %v565
  // Predicated region
  $region30: #{rewarder_apply.1} parent=0 // pred_check
    _
  $region31: #{rewarder_apply.1} parent=0 // pred_check_branch
    %568 = sbr.rel (0) target = $region33
  $region32: #{rewarder_apply.1} parent=0 // pred_region
    _
  $region33: #{rewarder_apply.1} parent=0 // pred_fallthru
    _
  // Predicated region
  $region34: #{rewarder_apply.1} parent=0 // pred_check
    _
  $region35: #{rewarder_apply.1} parent=0 // pred_check_branch
    %570 = sbr.rel (0) target = $region37
  $region36: #{rewarder_apply.1} parent=0 // pred_region
    _
  $region37: #{rewarder_apply.1} parent=0 // pred_fallthru
    _

</llo_original>
